<compile_context>
chip_gen: v5e
topology: v5e:2x2
jax: 0.10.0
libtpu: 0.0.40
codegen_flags: <defaults>
</compile_context>

<pallas_src>
import functools

import jax
import jax.numpy as jnp
from jax.experimental import pallas as pl
from jax.experimental.pallas import tpu as pltpu

OUT_LANES = 128  # lane-dense logits slab; lanes 0..1 hold the real logits


def _strip_kernel(p_ref, cw_ref, cb_ref, fw_ref, fb_ref, o_ref, *,
                  TB, HW, KC, HID_P):
    """One grid step = TB batch elements.

    p_ref : (TB, HW, KC)        bf16 im2col patches
    cw_ref: (KC, HID_P)         bf16 im2col conv weight (HID zero-padded to 128 lanes)
    cb_ref: (1, HID_P)          f32 conv bias (zero-padded)
    fw_ref: (2, HID_P)          f32 fc weight, pre-scaled by 1/HW (zero-padded)
    fb_ref: (1, 2)              f32 fc bias
    o_ref : (TB, 1, OUT_LANES)  f32 lane-dense logits slab
    """
    # Single MXU matmul: (TB*HW, KC) @ (KC, HID_P), f32 accumulation.
    # Merging the two leading dims (TB, HW) is layout-free (KC stays on lanes).
    patches = p_ref[...].reshape(TB * HW, KC)
    acc = jnp.dot(patches, cw_ref[...], preferred_element_type=jnp.float32)
    acc = jnp.maximum(acc + cb_ref[...], 0.0)                       # bias + ReLU

    # Global average pool over H*W per batch element -> (TB, HID_P).
    # 1/HW is folded into fw_ref, so only the sum happens here (XLU sublane reduce).
    feat = acc.reshape(TB, HW, HID_P).sum(axis=1)

    # fc head on VPU/XLU (an MXU push for an N=2 matmul would be wasted):
    #   logit_j = sum_lanes(feat * (w_j / HW)) + b_j
    l0 = jnp.sum(feat * fw_ref[0:1, :], axis=-1, keepdims=True) + fb_ref[:, 0:1]
    l1 = jnp.sum(feat * fw_ref[1:2, :], axis=-1, keepdims=True) + fb_ref[:, 1:2]

    # Scatter the two logits into a lane-dense (TB, OUT_LANES) slab (unmasked vst).
    lane = jax.lax.broadcasted_iota(jnp.int32, (TB, OUT_LANES), 1)
    slab = jnp.where(lane == 0, l0, jnp.where(lane == 1, l1, 0.0))
    o_ref[...] = slab.reshape(TB, 1, OUT_LANES)


def _pick_tb(B, HW, KC, *, bytes_per_elt=2, vmem_budget=8 << 20):
    """Largest divisor of B keeping >= 2 grid steps (when possible) and the
    double-buffered bf16 patch tile under the VMEM budget."""
    best = 1
    for cand in range(1, B + 1):
        if B % cand != 0:
            continue
        if B >= 2 and (B // cand) < 2:           # keep both v7x TCs busy
            continue
        if 2 * cand * HW * KC * bytes_per_elt > vmem_budget:
            continue
        best = cand
    return best


def strip_model_forward(x_nchw, conv_w_oihw, conv_b, fc_w, fc_b, *, tb=None):
    """x_nchw: (B, C, H, W) float32.  Returns logits (B, 2) float32."""
    B, C, H, W = x_nchw.shape
    HID = conv_w_oihw.shape[0]
    HW = H * W
    KC = 9 * C
    HID_P = max(((HID + 127) // 128) * 128, 128)

    if tb is None:
        tb = _pick_tb(B, HW, KC)
    assert B % tb == 0
    NB = B // tb

    # ---- wrapper-side glue (plain JAX): layout, im2col, lane padding, bf16 ----
    x_nhwc = jnp.transpose(x_nchw, (0, 2, 3, 1))                    # NCHW -> NHWC
    x_pad = jnp.pad(x_nhwc, ((0, 0), (1, 1), (1, 1), (0, 0)))       # "same" pad
    taps = [x_pad[:, kh:kh + H, kw:kw + W, :]
            for kh in range(3) for kw in range(3)]
    patches = jnp.concatenate(taps, axis=-1)                        # (B, H, W, 9C)
    patches = patches.reshape(B, HW, KC).astype(jnp.bfloat16)

    cw = jnp.transpose(conv_w_oihw, (2, 3, 1, 0)).reshape(KC, HID)  # (9C, HID)
    cw = jnp.pad(cw, ((0, 0), (0, HID_P - HID))).astype(jnp.bfloat16)
    cb = jnp.pad(conv_b.reshape(1, HID),
                 ((0, 0), (0, HID_P - HID))).astype(jnp.float32)    # (1, HID_P)
    # Fold the global-average-pool 1/HW scale into the fc weight.
    fw = jnp.pad(fc_w * (1.0 / HW),
                 ((0, 0), (0, HID_P - HID))).astype(jnp.float32)    # (2, HID_P)
    fb = fc_b.reshape(1, 2).astype(jnp.float32)

    kernel = functools.partial(_strip_kernel, TB=tb, HW=HW, KC=KC, HID_P=HID_P)

    out = pl.pallas_call(
        kernel,
        out_shape=jax.ShapeDtypeStruct((B, 1, OUT_LANES), jnp.float32),
        grid_spec=pltpu.PrefetchScalarGridSpec(
            num_scalar_prefetch=0,
            grid=(NB,),
            in_specs=[
                pl.BlockSpec((tb, HW, KC), lambda b: (b, 0, 0)),
                pl.BlockSpec((KC, HID_P), lambda b: (0, 0)),
                pl.BlockSpec((1, HID_P), lambda b: (0, 0)),
                pl.BlockSpec((2, HID_P), lambda b: (0, 0)),
                pl.BlockSpec((1, 2), lambda b: (0, 0)),
            ],
            out_specs=pl.BlockSpec((tb, 1, OUT_LANES), lambda b: (b, 0, 0)),
        ),
        compiler_params=pltpu.CompilerParams(
            dimension_semantics=("parallel",)),
    )(patches, cw, cb, fw, fb)

    return out[:, 0, :2]                                            # (B, 2)


def strip_model_reference(x_nchw, conv_w_oihw, conv_b, fc_w, fc_b):
    """Pure-JAX f32 reference (conv2d(padding=1) + ReLU + GAP + Linear)."""
    y = jax.lax.conv_general_dilated(
        x_nchw, conv_w_oihw, window_strides=(1, 1), padding="SAME",
        dimension_numbers=("NCHW", "OIHW", "NCHW"))
    y = y + conv_b[None, :, None, None]
    y = jnp.maximum(y, 0.0)
    feat = jnp.mean(y, axis=(2, 3))              # (B, hidden)
    return feat @ fc_w.T + fc_b                  # (B, 2)


if __name__ == "__main__":
    B, C, H, W, HID = 2, 4, 16, 16, 32

    key = jax.random.PRNGKey(0)
    k_x, k_cw, k_cb, k_fw = jax.random.split(key, 4)

    x = jax.random.normal(k_x, (B, C, H, W), dtype=jnp.float32)
    conv_w = 0.1 * jax.random.normal(k_cw, (HID, C, 3, 3), dtype=jnp.float32)
    conv_b = 0.1 * jax.random.normal(k_cb, (HID,), dtype=jnp.float32)
    # fc: nn.Linear(hidden_size, 2) with reinit-style normal weights, zero bias.
    fc_w = 0.02 * jax.random.normal(k_fw, (2, HID), dtype=jnp.float32)
    fc_b = jnp.zeros((2,), dtype=jnp.float32)

    logits = strip_model_forward(x, conv_w, conv_b, fc_w, fc_b)
    jax.block_until_ready(logits)

    ref = strip_model_reference(x, conv_w, conv_b, fc_w, fc_b)
    assert logits.shape == (B, 2)
    # tolerance accounts for bf16 MXU inputs (f32 accumulation inside the kernel)
    assert jnp.allclose(logits, ref, rtol=5e-2, atol=5e-3), (logits, ref)

    print("KERNEL_OK")
</pallas_src>

<mosaic_0001>
module attributes {stable_mosaic.version = 11 : i64} {
  func.func @_strip_kernel(%arg0: i32, %arg1: memref<1x256x36xbf16, #tpu.memory_space<vmem>>, %arg2: memref<36x128xbf16, #tpu.memory_space<vmem>>, %arg3: memref<1x128xf32, #tpu.memory_space<vmem>>, %arg4: memref<2x128xf32, #tpu.memory_space<vmem>>, %arg5: memref<1x2xf32, #tpu.memory_space<vmem>>, %arg6: memref<1x1x128xf32, #tpu.memory_space<vmem>>) attributes {dimension_semantics = [#tpu.dimension_semantics<parallel>], iteration_bounds = array<i64: 2>, scalar_prefetch = 0 : i64, scratch_operands = 0 : i64, tpu.core_type = #tpu.core_type<tc>, window_params = [{transform_indices = @transform_0, window_bounds = array<i64: 1, 256, 36>}, {pipeline_mode = #tpu.pipeline_mode<synchronous>, transform_indices = @transform_1, window_bounds = array<i64: 36, 128>}, {pipeline_mode = #tpu.pipeline_mode<synchronous>, transform_indices = @transform_2, window_bounds = array<i64: 1, 128>}, {pipeline_mode = #tpu.pipeline_mode<synchronous>, transform_indices = @transform_3, window_bounds = array<i64: 2, 128>}, {pipeline_mode = #tpu.pipeline_mode<synchronous>, transform_indices = @transform_4, window_bounds = array<i64: 1, 2>}, {transform_indices = @transform_5, window_bounds = array<i64: 1, 1, 128>}]} {
    %c0 = arith.constant 0 : index
    %c0_0 = arith.constant 0 : index
    %c0_1 = arith.constant 0 : index
    %0 = vector.load %arg1[%c0, %c0_0, %c0_1] : memref<1x256x36xbf16, #tpu.memory_space<vmem>>, vector<1x256x36xbf16>
    %1 = vector.shape_cast %0 : vector<1x256x36xbf16> to vector<256x36xbf16>
    %c0_2 = arith.constant 0 : index
    %c0_3 = arith.constant 0 : index
    %2 = vector.load %arg2[%c0_2, %c0_3] : memref<36x128xbf16, #tpu.memory_space<vmem>>, vector<36x128xbf16>
    %cst = arith.constant dense<0.000000e+00> : vector<256x128xf32>
    %3 = tpu.matmul %1, %2, %cst {dimension_numbers = #tpu.dot_dimension_numbers<[1], [0], [0], [1], [0, 0, 1, 1], [], []>} : vector<256x36xbf16>, vector<36x128xbf16>, vector<256x128xf32> -> vector<256x128xf32>
    %c0_4 = arith.constant 0 : index
    %c0_5 = arith.constant 0 : index
    %4 = vector.load %arg3[%c0_4, %c0_5] : memref<1x128xf32, #tpu.memory_space<vmem>>, vector<1x128xf32>
    %5 = vector.broadcast %4 : vector<1x128xf32> to vector<256x128xf32>
    %6 = arith.addf %3, %5 : vector<256x128xf32>
    %cst_6 = arith.constant 0.000000e+00 : f32
    %7 = vector.broadcast %cst_6 : f32 to vector<256x128xf32>
    %8 = arith.maximumf %6, %7 : vector<256x128xf32>
    %9 = vector.shape_cast %8 : vector<256x128xf32> to vector<1x256x128xf32>
    %cst_7 = arith.constant dense<0.000000e+00> : vector<1x128xf32>
    %10 = vector.multi_reduction <add>, %9, %cst_7 [1] : vector<1x256x128xf32> to vector<1x128xf32>
    %c0_8 = arith.constant 0 : index
    %c0_9 = arith.constant 0 : index
    %11 = vector.load %arg4[%c0_8, %c0_9] : memref<2x128xf32, #tpu.memory_space<vmem>>, vector<1x128xf32>
    %12 = arith.mulf %10, %11 : vector<1x128xf32>
    %cst_10 = arith.constant dense<0.000000e+00> : vector<1xf32>
    %13 = vector.multi_reduction <add>, %12, %cst_10 [1] : vector<1x128xf32> to vector<1xf32>
    %14 = vector.shape_cast %13 : vector<1xf32> to vector<1x1xf32>
    %c0_11 = arith.constant 0 : index
    %c0_12 = arith.constant 0 : index
    %15 = vector.load %arg5[%c0_11, %c0_12] : memref<1x2xf32, #tpu.memory_space<vmem>>, vector<1x1xf32>
    %16 = arith.addf %14, %15 : vector<1x1xf32>
    %c1 = arith.constant 1 : index
    %c0_13 = arith.constant 0 : index
    %17 = vector.load %arg4[%c1, %c0_13] : memref<2x128xf32, #tpu.memory_space<vmem>>, vector<1x128xf32>
    %18 = arith.mulf %10, %17 : vector<1x128xf32>
    %cst_14 = arith.constant dense<0.000000e+00> : vector<1xf32>
    %19 = vector.multi_reduction <add>, %18, %cst_14 [1] : vector<1x128xf32> to vector<1xf32>
    %20 = vector.shape_cast %19 : vector<1xf32> to vector<1x1xf32>
    %c0_15 = arith.constant 0 : index
    %c1_16 = arith.constant 1 : index
    %21 = vector.load %arg5[%c0_15, %c1_16] : memref<1x2xf32, #tpu.memory_space<vmem>>, vector<1x1xf32>
    %22 = arith.addf %20, %21 : vector<1x1xf32>
    %23 = tpu.iota {dimensions = array<i32: 1>} : vector<1x128xi32>
    %c0_i32 = arith.constant 0 : i32
    %24 = vector.broadcast %c0_i32 : i32 to vector<1x128xi32>
    %25 = arith.cmpi eq, %23, %24 : vector<1x128xi32>
    %c1_i32 = arith.constant 1 : i32
    %26 = vector.broadcast %c1_i32 : i32 to vector<1x128xi32>
    %27 = arith.cmpi eq, %23, %26 : vector<1x128xi32>
    %cst_17 = arith.constant 0.000000e+00 : f32
    %28 = vector.shape_cast %22 : vector<1x1xf32> to vector<1x1xf32>
    %29 = vector.broadcast %28 : vector<1x1xf32> to vector<1x128xf32>
    %30 = vector.broadcast %cst_17 : f32 to vector<1x128xf32>
    %31 = arith.select %27, %29, %30 : vector<1x128xi1>, vector<1x128xf32>
    %32 = vector.shape_cast %16 : vector<1x1xf32> to vector<1x1xf32>
    %33 = vector.broadcast %32 : vector<1x1xf32> to vector<1x128xf32>
    %34 = arith.select %25, %33, %31 : vector<1x128xi1>, vector<1x128xf32>
    %35 = vector.shape_cast %34 : vector<1x128xf32> to vector<1x1x128xf32>
    %c0_18 = arith.constant 0 : index
    %c0_19 = arith.constant 0 : index
    %c0_20 = arith.constant 0 : index
    %36 = vector.load %arg6[%c0_18, %c0_19, %c0_20] : memref<1x1x128xf32, #tpu.memory_space<vmem>>, vector<1x1x128xf32>
    tpu.vector_store %arg6[%c0_18, %c0_19, %c0_20], %35 {strides = array<i32>} : memref<1x1x128xf32, #tpu.memory_space<vmem>>, vector<1x1x128xf32>,
    return
  }
  func.func @transform_0(%arg0: i32) -> (i32, i32, i32) {
    %c0_i32 = arith.constant 0 : i32
    %c0_i32_0 = arith.constant 0 : i32
    %c0_i32_1 = arith.constant 0 : i32
    return %arg0, %c0_i32, %c0_i32_0 : i32, i32, i32
  }
  func.func @transform_1(%arg0: i32) -> (i32, i32) {
    %c0_i32 = arith.constant 0 : i32
    %c0_i32_0 = arith.constant 0 : i32
    %c0_i32_1 = arith.constant 0 : i32
    return %c0_i32, %c0_i32_0 : i32, i32
  }
  func.func @transform_2(%arg0: i32) -> (i32, i32) {
    %c0_i32 = arith.constant 0 : i32
    %c0_i32_0 = arith.constant 0 : i32
    %c0_i32_1 = arith.constant 0 : i32
    return %c0_i32, %c0_i32_0 : i32, i32
  }
  func.func @transform_3(%arg0: i32) -> (i32, i32) {
    %c0_i32 = arith.constant 0 : i32
    %c0_i32_0 = arith.constant 0 : i32
    %c0_i32_1 = arith.constant 0 : i32
    return %c0_i32, %c0_i32_0 : i32, i32
  }
  func.func @transform_4(%arg0: i32) -> (i32, i32) {
    %c0_i32 = arith.constant 0 : i32
    %c0_i32_0 = arith.constant 0 : i32
    %c0_i32_1 = arith.constant 0 : i32
    return %c0_i32, %c0_i32_0 : i32, i32
  }
  func.func @transform_5(%arg0: i32) -> (i32, i32, i32) {
    %c0_i32 = arith.constant 0 : i32
    %c0_i32_0 = arith.constant 0 : i32
    %c0_i32_1 = arith.constant 0 : i32
    return %arg0, %c0_i32, %c0_i32_0 : i32, i32, i32
  }
}

</mosaic_0001>

<llo_original>
// kernel: tpu_custom_call.1
$region0: #{tpu_custom_call.1}
  #allocation0 [shape = 'u32[]', space=smem, size = 0x4, offset = 0x4, fixed_abs, tag = 'smem constant byte address 0x4 - core index']
  #allocation1 [shape = 'u32[72,128]{1,0:T(1,128)}', space=vmem, size = 0x9000, scoped, tag = 'internal scratch']
  %s0 = inlined_call_operand.vmem [shape: bf16[2,256,36], index: 0, kind: input, shape index: {}]
  %s1 = inlined_call_operand.vmem [shape: bf16[36,128], index: 1, kind: input, shape index: {}]
  %s2 = inlined_call_operand.vmem [shape: f32[1,128], index: 2, kind: input, shape index: {}]
  %s3 = inlined_call_operand.vmem [shape: f32[2,128], index: 3, kind: input, shape index: {}]
  %s4 = inlined_call_operand.vmem [shape: f32[1,2], index: 4, kind: input, shape index: {}]
  %s5 = inlined_call_operand.hbm [shape: f32[2,1,128], index: 5, kind: output, shape index: {}]
  %s6 = sld [smem:[#allocation0]]
  $region53: #{tpu_custom_call.1} parent=0
    _
  %s8 = ssub.s32 1, %s6
  %s9 = scalar_select 0, %s8, %s6
  $region1: #{tpu_custom_call.1} parent=0
    #allocation2 [shape = 'u8[1024]{0}', space=vmem, size = 0x400, scoped, tag = 'output window, operand 0']
    #allocation3 [shape = 's32[2]{0}', space=sflag, size = 0x8, scoped, tag = 'scoped memory for tpu_custom_call.1']
    %10 = vsyncpa [#allocation3], 0
    %s11 = scalar_lea.sflag [#allocation3], 1
    %12 = vsyncpa %s11, 0
    loop: start=0, step=1, limit=4
    $region2: #{tpu_custom_call.1} parent=1 // loop_pre_header
      _
    $region3: #{tpu_custom_call.1} parent=1 // loop_header
      %s14 = sphi 0, %s18
      %p15 = scmp.ge.s32.totalorder %s14, 4
      %s24 = sphi 0, %s26
      %s27 = sphi 0, %s24
      %s28 = sphi 0, %s27
      %s44 = sphi 0, %s28
      %s48 = sphi 0, %s48
      %s50 = sphi 0, %s48
      %s51 = sphi 0, %s50
      %s65 = sphi 0, %s51
      %s69 = sphi 0, %s69
      %s71 = sphi 0, %s69
      %s72 = sphi 0, %s71
      %s86 = sphi 0, %s72
      %s90 = sphi 0, %s90
      %s92 = sphi 0, %s90
      %s93 = sphi 0, %s92
      %s107 = sphi 0, %s93
      %s111 = sphi 0, %s111
      %s113 = sphi 0, %s111
      %s114 = sphi 0, %s113
      %s128 = sphi 0, %s114
      %s134 = sphi 0, %s136
      %s137 = sphi 0, %s134
      %s138 = sphi 0, %s137
      %s154 = sphi 0, %s138
    $region4: #{tpu_custom_call.1} parent=1 // loop_header_branch
      %17 = sbr.rel (%p15) target = $region8
    $region5: #{tpu_custom_call.1} parent=1 // loop_body
      %s19 = ssub.s32 %s14, 1
      %s20 = ssub.s32 %s14, 2
      %s21 = sadd.s32 %s14, 1
      %s22 = ssub.s32 %s14, %s21
      %p23 = scmp.eq.s32.totalorder %s22, 0
      %s25 = sadd.s32 %s24, 1
      %s26 = scalar_select %p23, %s24, %s25
      %p29 = pneg %p23
      %p30 = scmp.eq.s32.totalorder %s14, 1
      %p31 = por %p29, %p30
      %p32 = scmp.ne.s32.totalorder %s24, %s27
      %p33 = scmp.eq.s32.totalorder %s14, 0
      %p34 = por %p32, %p33
      %p35 = scmp.ne.s32.totalorder %s24, %s27
      %p36 = scmp.eq.s32.totalorder %s19, 1
      %p37 = por %p35, %p36
      %p38 = scmp.ne.s32.totalorder %s27, %s28
      %p39 = scmp.eq.s32.totalorder %s19, 0
      %p40 = por %p38, %p39
      %p41 = scmp.ne.s32.totalorder %s27, %s28
      %p42 = scmp.eq.s32.totalorder %s20, 1
      %p43 = por %p41, %p42
      %p45 = scmp.ne.s32.totalorder %s28, %s44
      %p46 = scmp.eq.s32.totalorder %s20, 0
      %p47 = por %p45, %p46
      %s49 = sadd.s32 %s48, 1
      %p52 = scmp.eq.s32.totalorder %s14, 1
      %p53 = scmp.ne.s32.totalorder %s48, %s50
      %p54 = scmp.eq.s32.totalorder %s14, 0
      %p55 = por %p53, %p54
      %p56 = scmp.ne.s32.totalorder %s48, %s50
      %p57 = scmp.eq.s32.totalorder %s19, 1
      %p58 = por %p56, %p57
      %p59 = scmp.ne.s32.totalorder %s50, %s51
      %p60 = scmp.eq.s32.totalorder %s19, 0
      %p61 = por %p59, %p60
      %p62 = scmp.ne.s32.totalorder %s50, %s51
      %p63 = scmp.eq.s32.totalorder %s20, 1
      %p64 = por %p62, %p63
      %p66 = scmp.ne.s32.totalorder %s51, %s65
      %p67 = scmp.eq.s32.totalorder %s20, 0
      %p68 = por %p66, %p67
      %s70 = sadd.s32 %s69, 1
      %p73 = scmp.eq.s32.totalorder %s14, 1
      %p74 = scmp.ne.s32.totalorder %s69, %s71
      %p75 = scmp.eq.s32.totalorder %s14, 0
      %p76 = por %p74, %p75
      %p77 = scmp.ne.s32.totalorder %s69, %s71
      %p78 = scmp.eq.s32.totalorder %s19, 1
      %p79 = por %p77, %p78
      %p80 = scmp.ne.s32.totalorder %s71, %s72
      %p81 = scmp.eq.s32.totalorder %s19, 0
      %p82 = por %p80, %p81
      %p83 = scmp.ne.s32.totalorder %s71, %s72
      %p84 = scmp.eq.s32.totalorder %s20, 1
      %p85 = por %p83, %p84
      %p87 = scmp.ne.s32.totalorder %s72, %s86
      %p88 = scmp.eq.s32.totalorder %s20, 0
      %p89 = por %p87, %p88
      %s91 = sadd.s32 %s90, 1
      %p94 = scmp.eq.s32.totalorder %s14, 1
      %p95 = scmp.ne.s32.totalorder %s90, %s92
      %p96 = scmp.eq.s32.totalorder %s14, 0
      %p97 = por %p95, %p96
      %p98 = scmp.ne.s32.totalorder %s90, %s92
      %p99 = scmp.eq.s32.totalorder %s19, 1
      %p100 = por %p98, %p99
      %p101 = scmp.ne.s32.totalorder %s92, %s93
      %p102 = scmp.eq.s32.totalorder %s19, 0
      %p103 = por %p101, %p102
      %p104 = scmp.ne.s32.totalorder %s92, %s93
      %p105 = scmp.eq.s32.totalorder %s20, 1
      %p106 = por %p104, %p105
      %p108 = scmp.ne.s32.totalorder %s93, %s107
      %p109 = scmp.eq.s32.totalorder %s20, 0
      %p110 = por %p108, %p109
      %s112 = sadd.s32 %s111, 1
      %p115 = scmp.eq.s32.totalorder %s14, 1
      %p116 = scmp.ne.s32.totalorder %s111, %s113
      %p117 = scmp.eq.s32.totalorder %s14, 0
      %p118 = por %p116, %p117
      %p119 = scmp.ne.s32.totalorder %s111, %s113
      %p120 = scmp.eq.s32.totalorder %s19, 1
      %p121 = por %p119, %p120
      %p122 = scmp.ne.s32.totalorder %s113, %s114
      %p123 = scmp.eq.s32.totalorder %s19, 0
      %p124 = por %p122, %p123
      %p125 = scmp.ne.s32.totalorder %s113, %s114
      %p126 = scmp.eq.s32.totalorder %s20, 1
      %p127 = por %p125, %p126
      %p129 = scmp.ne.s32.totalorder %s114, %s128
      %p130 = scmp.eq.s32.totalorder %s20, 0
      %p131 = por %p129, %p130
      %s132 = ssub.s32 %s14, %s21
      %p133 = scmp.eq.s32.totalorder %s132, 0
      %s135 = sadd.s32 %s134, 1
      %s136 = scalar_select %p133, %s134, %s135
      %p139 = pneg %p133
      %p140 = scmp.eq.s32.totalorder %s14, 1
      %p141 = por %p139, %p140
      %p142 = scmp.ne.s32.totalorder %s134, %s137
      %p143 = scmp.eq.s32.totalorder %s14, 0
      %p144 = por %p142, %p143
      %p145 = scmp.ne.s32.totalorder %s134, %s137
      %p146 = scmp.eq.s32.totalorder %s19, 1
      %p147 = por %p145, %p146
      %p148 = scmp.ne.s32.totalorder %s137, %s138
      %p149 = scmp.eq.s32.totalorder %s19, 0
      %p150 = por %p148, %p149
      %p151 = scmp.ne.s32.totalorder %s137, %s138
      %p152 = scmp.eq.s32.totalorder %s20, 1
      %p153 = por %p151, %p152
      %p155 = scmp.ne.s32.totalorder %s138, %s154
      %p156 = scmp.eq.s32.totalorder %s20, 0
      %p157 = por %p155, %p156
      %p158 = scmp.le.s32.totalorder 1, %s14
      %p159 = scmp.lt.s32.totalorder %s14, 3
      %p160 = pnand %p158, %p159
      %p161 = pneg %p160
      // Predicated region
      $region9: #{tpu_custom_call.1} parent=5 // pred_check
        _
      $region10: #{tpu_custom_call.1} parent=5 // pred_check_branch
        %163 = sbr.rel (%p160) target = $region12
      $region11: #{tpu_custom_call.1} parent=5 // pred_region
        %s164 = ssub.s32 %s14, 1
        // Predicated region
        $region13: #{tpu_custom_call.1} parent=11 // pred_check
          %p165 = pneg %p61
        $region14: #{tpu_custom_call.1} parent=11 // pred_check_branch
          %167 = sbr.rel (%p165) target = $region16
        $region15: #{tpu_custom_call.1} parent=11 // pred_region
          _
        $region16: #{tpu_custom_call.1} parent=11 // pred_fallthru
          _
        // Predicated region
        $region17: #{tpu_custom_call.1} parent=11 // pred_check
          %p168 = pneg %p82
        $region18: #{tpu_custom_call.1} parent=11 // pred_check_branch
          %170 = sbr.rel (%p168) target = $region20
        $region19: #{tpu_custom_call.1} parent=11 // pred_region
          _
        $region20: #{tpu_custom_call.1} parent=11 // pred_fallthru
          _
        // Predicated region
        $region21: #{tpu_custom_call.1} parent=11 // pred_check
          %p171 = pneg %p103
        $region22: #{tpu_custom_call.1} parent=11 // pred_check_branch
          %173 = sbr.rel (%p171) target = $region24
        $region23: #{tpu_custom_call.1} parent=11 // pred_region
          _
        $region24: #{tpu_custom_call.1} parent=11 // pred_fallthru
          _
        // Predicated region
        $region25: #{tpu_custom_call.1} parent=11 // pred_check
          %p174 = pneg %p124
        $region26: #{tpu_custom_call.1} parent=11 // pred_check_branch
          %176 = sbr.rel (%p174) target = $region28
        $region27: #{tpu_custom_call.1} parent=11 // pred_region
          _
        $region28: #{tpu_custom_call.1} parent=11 // pred_fallthru
          _
      $region12: #{tpu_custom_call.1} parent=5 // pred_fallthru
        _
      %p177 = scmp.lt.s32.totalorder %s14, 2
      // Predicated region
      $region29: #{tpu_custom_call.1} parent=5 // pred_check
        %p178 = pneg %p177
      $region30: #{tpu_custom_call.1} parent=5 // pred_check_branch
        %180 = sbr.rel (%p178) target = $region32
      $region31: #{tpu_custom_call.1} parent=5 // pred_region
        // Predicated region
        $region33: #{tpu_custom_call.1} parent=31 // pred_check
          %p181 = pneg %p34
        $region34: #{tpu_custom_call.1} parent=31 // pred_check_branch
          %183 = sbr.rel (%p181) target = $region36
        $region35: #{tpu_custom_call.1} parent=31 // pred_region
          %p184 = scmp.lt.s32.totalorder %s14, 1
          %s185 = scalar_select %p184, %s14, 1
          %s186 = smul.addr %s185, 32
          %s187 = smul.addr %s186, 4
          %s188 = scalar_lea.vmem %s0, %s187
        $region36: #{tpu_custom_call.1} parent=31 // pred_fallthru
          _
      $region32: #{tpu_custom_call.1} parent=5 // pred_fallthru
        _
      %p189 = scmp.le.s32.totalorder 1, %s14
      %p190 = scmp.lt.s32.totalorder %s14, 3
      %p191 = pnand %p189, %p190
      %p192 = pneg %p191
      // Predicated region
      $region37: #{tpu_custom_call.1} parent=5 // pred_check
        _
      $region38: #{tpu_custom_call.1} parent=5 // pred_check_branch
        %194 = sbr.rel (%p191) target = $region40
      $region39: #{tpu_custom_call.1} parent=5 // pred_region
        %s195 = ssub.s32 %s14, 1
        %p196 = scmp.lt.s32.totalorder %s19, 1
        %s197 = scalar_select %p196, %s19, 1
        %s198 = smul.addr %s197, 32
        %s199 = smul.addr %s198, 4
        %s200 = scalar_lea.vmem %s0, %s199
        %p201 = pneg %p40
        %p202 = pneg %p37
        %p203 = pneg %p61
        %p204 = pneg %p58
        %p205 = pneg %p82
        %p206 = pneg %p79
        %p207 = pneg %p103
        %p208 = pneg %p100
        %p209 = pneg %p124
        %p210 = pneg %p121
        %p211 = pneg %p150
        %p212 = pneg %p147
        %s213 = sand.u32 %s137, 1
        %s214 = scalar_lea.sflag [#allocation3], %s213
        %s215 = sand.u32 %s137, 1
        %s216 = scalar_lea.vmem [#allocation2], %s215
        %p217 = scmp.lt.s32.totalorder %s19, 1
        %s218 = scalar_select %p217, %s19, 1
        %s219 = smul.addr %s218, 32
        %s220 = smul.addr %s219, 4
        %s221 = scalar_lea.vmem %s0, %s220
        %v223 = vld [vmem:[%s221] sm:$0xf]
        %v224 = vld [vmem:[%s221 + $0x4] sm:$0xf]
        %v225 = vld [vmem:[%s221 + $0x8] sm:$0xf]
        %v226 = vld [vmem:[%s221 + $0xc] sm:$0xf]
        %v227 = vld [vmem:[%s221 + $0x10] sm:$0xf]
        %v228 = vld [vmem:[%s221 + $0x14] sm:$0xf]
        %v229 = vld [vmem:[%s221 + $0x18] sm:$0xf]
        %v230 = vld [vmem:[%s221 + $0x1c] sm:$0xf]
        %v231 = vld [vmem:[%s221 + $0x20] sm:$0xf]
        %v232 = vld [vmem:[%s221 + $0x24] sm:$0xf]
        %v233 = vld [vmem:[%s221 + $0x28] sm:$0xf]
        %v234 = vld [vmem:[%s221 + $0x2c] sm:$0xf]
        %v235 = vld [vmem:[%s221 + $0x30] sm:$0xf]
        %v236 = vld [vmem:[%s221 + $0x34] sm:$0xf]
        %v237 = vld [vmem:[%s221 + $0x38] sm:$0xf]
        %v238 = vld [vmem:[%s221 + $0x3c] sm:$0xf]
        %v239 = vld [vmem:[%s221 + $0x40] sm:$0xf]
        %v240 = vld [vmem:[%s221 + $0x44] sm:$0xf]
        %v241 = vld [vmem:[%s221 + $0x48] sm:$0xf]
        %v242 = vld [vmem:[%s221 + $0x4c] sm:$0xf]
        %v243 = vld [vmem:[%s221 + $0x50] sm:$0xf]
        %v244 = vld [vmem:[%s221 + $0x54] sm:$0xf]
        %v245 = vld [vmem:[%s221 + $0x58] sm:$0xf]
        %v246 = vld [vmem:[%s221 + $0x5c] sm:$0xf]
        %v247 = vld [vmem:[%s221 + $0x60] sm:$0xf]
        %v248 = vld [vmem:[%s221 + $0x64] sm:$0xf]
        %v249 = vld [vmem:[%s221 + $0x68] sm:$0xf]
        %v250 = vld [vmem:[%s221 + $0x6c] sm:$0xf]
        %v251 = vld [vmem:[%s221 + $0x70] sm:$0xf]
        %v252 = vld [vmem:[%s221 + $0x74] sm:$0xf]
        %v253 = vld [vmem:[%s221 + $0x78] sm:$0xf]
        %v254 = vld [vmem:[%s221 + $0x7c] sm:$0xf]
        %v255 = vld [vmem:[%s1] sm:$0xf]
        %v256 = vld [vmem:[%s1 + $0x4] sm:$0xf]
        %v257 = vld [vmem:[%s1 + $0x8] sm:$0xf]
        %v258 = vld [vmem:[%s1 + $0xc] sm:$0xf]
        %v259 = vld [vmem:[%s1 + $0x10] sm:$0x3]
        %v260 = vld [vmem:[%s2] sm:$0x1]
        %v262 = vperm.slane %v260, 0
        %v296 = vunpack.c.l.b16 %v223
        %v297 = vunpack.c.l.b16 %v224
        %v298 = vunpack.c.l.b16 %v225
        %v299 = vunpack.c.l.b16 %v226
        %v300 = vunpack.c.l.b16 %v227
        %v301 = vunpack.c.l.b16 %v228
        %v302 = vunpack.c.l.b16 %v229
        %v303 = vunpack.c.l.b16 %v230
        %v304 = vunpack.c.l.b16 %v231
        %v305 = vunpack.c.l.b16 %v232
        %v306 = vunpack.c.l.b16 %v233
        %v307 = vunpack.c.l.b16 %v234
        %v308 = vunpack.c.l.b16 %v235
        %v309 = vunpack.c.l.b16 %v236
        %v310 = vunpack.c.l.b16 %v237
        %v311 = vunpack.c.l.b16 %v238
        %v312 = vunpack.c.l.b16 %v239
        %v313 = vunpack.c.l.b16 %v240
        %v314 = vunpack.c.l.b16 %v241
        %v315 = vunpack.c.l.b16 %v242
        %v316 = vunpack.c.l.b16 %v243
        %v317 = vunpack.c.l.b16 %v244
        %v318 = vunpack.c.l.b16 %v245
        %v319 = vunpack.c.l.b16 %v246
        %v320 = vunpack.c.l.b16 %v247
        %v321 = vunpack.c.l.b16 %v248
        %v322 = vunpack.c.l.b16 %v249
        %v323 = vunpack.c.l.b16 %v250
        %v324 = vunpack.c.l.b16 %v251
        %v325 = vunpack.c.l.b16 %v252
        %v326 = vunpack.c.l.b16 %v253
        %v327 = vunpack.c.l.b16 %v254
        %v328 = vpack.c.b16 %v297, %v296
        %v329 = vpack.c.b16 %v299, %v298
        %v330 = vpack.c.b16 %v301, %v300
        %v331 = vpack.c.b16 %v303, %v302
        %v332 = vpack.c.b16 %v305, %v304
        %v333 = vpack.c.b16 %v307, %v306
        %v334 = vpack.c.b16 %v309, %v308
        %v335 = vpack.c.b16 %v311, %v310
        %v336 = vpack.c.b16 %v313, %v312
        %v337 = vpack.c.b16 %v315, %v314
        %v338 = vpack.c.b16 %v317, %v316
        %v339 = vpack.c.b16 %v319, %v318
        %v340 = vpack.c.b16 %v321, %v320
        %v341 = vpack.c.b16 %v323, %v322
        %v342 = vpack.c.b16 %v325, %v324
        %v343 = vpack.c.b16 %v327, %v326
        %v349 = vunpack.c.l.b16 %v255
        %v350 = vunpack.c.l.b16 %v256
        %v351 = vunpack.c.l.b16 %v257
        %v352 = vunpack.c.l.b16 %v258
        %v353 = vunpack.c.l.b16 %v259
        %v354 = vpack.c.b16 %v350, %v349
        %v355 = vpack.c.b16 %v352, %v351
        %v356 = vpack.c.b16 %v353, %v353
        %vm359 = vcmask 293888
        %v361 = vsel %vm359, %v328, 0
        %v364 = vsel %vm359, %v329, 0
        %v367 = vsel %vm359, %v330, 0
        %v370 = vsel %vm359, %v331, 0
        %v373 = vsel %vm359, %v332, 0
        %v376 = vsel %vm359, %v333, 0
        %v379 = vsel %vm359, %v334, 0
        %v382 = vsel %vm359, %v335, 0
        %v385 = vsel %vm359, %v336, 0
        %v388 = vsel %vm359, %v337, 0
        %v391 = vsel %vm359, %v338, 0
        %v394 = vsel %vm359, %v339, 0
        %v397 = vsel %vm359, %v340, 0
        %v400 = vsel %vm359, %v341, 0
        %v403 = vsel %vm359, %v342, 0
        %v406 = vsel %vm359, %v343, 0
        %vm408 = vcmask 1041408
        %v410 = vsel %vm408, %v356, 0
        %412 = vmatpush.bf16.msra.mxu0 0
        %413 = vmatpush.bf16.msra.mxu0 0
        %414 = vmatpush.bf16.msra.mxu0 0
        %415 = vmatpush.bf16.msra.mxu0 0
        %416 = vmatpush.bf16.msra.mxu0 0
        %417 = vmatpush.bf16.msra.mxu0 %v410
        %418 = vmatpush.bf16.msra.mxu0 %v355
        %419 = vmatpush.bf16.msra.mxu0 %v354
        %420 = vmatmul.bf16.gmra.mxu0 %v361
        %v421 = vpop.f32.mrf.mxu0
        %v422 = vadd.f32 %v262, %v421
        %v423 = vpop.f32.mrf.mxu0
        %v424 = vadd.f32 %v262, %v423
        %425 = vmatmul.bf16.gmra.mxu0 %v364
        %v426 = vpop.f32.mrf.mxu0
        %v427 = vadd.f32 %v262, %v426
        %v428 = vpop.f32.mrf.mxu0
        %v429 = vadd.f32 %v262, %v428
        %430 = vmatmul.bf16.gmra.mxu0 %v367
        %v431 = vpop.f32.mrf.mxu0
        %v432 = vadd.f32 %v262, %v431
        %v433 = vpop.f32.mrf.mxu0
        %v434 = vadd.f32 %v262, %v433
        %435 = vmatmul.bf16.gmra.mxu0 %v370
        %v436 = vpop.f32.mrf.mxu0
        %v437 = vadd.f32 %v262, %v436
        %v438 = vpop.f32.mrf.mxu0
        %v439 = vadd.f32 %v262, %v438
        %440 = vmatmul.bf16.gmra.mxu0 %v373
        %v441 = vpop.f32.mrf.mxu0
        %v442 = vadd.f32 %v262, %v441
        %v443 = vpop.f32.mrf.mxu0
        %v444 = vadd.f32 %v262, %v443
        %445 = vmatmul.bf16.gmra.mxu0 %v376
        %v446 = vpop.f32.mrf.mxu0
        %v447 = vadd.f32 %v262, %v446
        %v448 = vpop.f32.mrf.mxu0
        %v449 = vadd.f32 %v262, %v448
        %450 = vmatmul.bf16.gmra.mxu0 %v379
        %v451 = vpop.f32.mrf.mxu0
        %v452 = vadd.f32 %v262, %v451
        %v453 = vpop.f32.mrf.mxu0
        %v454 = vadd.f32 %v262, %v453
        %455 = vmatmul.bf16.gmra.mxu0 %v382
        %v456 = vpop.f32.mrf.mxu0
        %v457 = vadd.f32 %v262, %v456
        %v458 = vpop.f32.mrf.mxu0
        %v459 = vadd.f32 %v262, %v458
        %460 = vmatmul.bf16.gmra.mxu0 %v385
        %v461 = vpop.f32.mrf.mxu0
        %v462 = vadd.f32 %v262, %v461
        %v463 = vpop.f32.mrf.mxu0
        %v464 = vadd.f32 %v262, %v463
        %465 = vmatmul.bf16.gmra.mxu0 %v388
        %v466 = vpop.f32.mrf.mxu0
        %v467 = vadd.f32 %v262, %v466
        %v468 = vpop.f32.mrf.mxu0
        %v469 = vadd.f32 %v262, %v468
        %470 = vmatmul.bf16.gmra.mxu0 %v391
        %v471 = vpop.f32.mrf.mxu0
        %v472 = vadd.f32 %v262, %v471
        %v473 = vpop.f32.mrf.mxu0
        %v474 = vadd.f32 %v262, %v473
        %475 = vmatmul.bf16.gmra.mxu0 %v394
        %v476 = vpop.f32.mrf.mxu0
        %v477 = vadd.f32 %v262, %v476
        %v478 = vpop.f32.mrf.mxu0
        %v479 = vadd.f32 %v262, %v478
        %480 = vmatmul.bf16.gmra.mxu0 %v397
        %v481 = vpop.f32.mrf.mxu0
        %v482 = vadd.f32 %v262, %v481
        %v483 = vpop.f32.mrf.mxu0
        %v484 = vadd.f32 %v262, %v483
        %485 = vmatmul.bf16.gmra.mxu0 %v400
        %v486 = vpop.f32.mrf.mxu0
        %v487 = vadd.f32 %v262, %v486
        %v488 = vpop.f32.mrf.mxu0
        %v489 = vadd.f32 %v262, %v488
        %490 = vmatmul.bf16.gmra.mxu0 %v403
        %v491 = vpop.f32.mrf.mxu0
        %v492 = vadd.f32 %v262, %v491
        %v493 = vpop.f32.mrf.mxu0
        %v494 = vadd.f32 %v262, %v493
        %495 = vmatmul.bf16.gmra.mxu0 %v406
        %v496 = vpop.f32.mrf.mxu0
        %v497 = vadd.f32 %v262, %v496
        %v498 = vpop.f32.mrf.mxu0
        %v499 = vadd.f32 %v262, %v498
        %500 = vdwg.mxu0
        %v501 = vmax.f32 %v422, 0.0
        %v502 = vmax.f32 %v424, 0.0
        %v503 = vmax.f32 %v427, 0.0
        %v504 = vmax.f32 %v429, 0.0
        %v505 = vmax.f32 %v432, 0.0
        %v506 = vmax.f32 %v434, 0.0
        %v507 = vmax.f32 %v437, 0.0
        %v508 = vmax.f32 %v439, 0.0
        %v509 = vmax.f32 %v442, 0.0
        %v510 = vmax.f32 %v444, 0.0
        %v511 = vmax.f32 %v447, 0.0
        %v512 = vmax.f32 %v449, 0.0
        %v513 = vmax.f32 %v452, 0.0
        %v514 = vmax.f32 %v454, 0.0
        %v515 = vmax.f32 %v457, 0.0
        %v516 = vmax.f32 %v459, 0.0
        %v517 = vmax.f32 %v462, 0.0
        %v518 = vmax.f32 %v464, 0.0
        %v519 = vmax.f32 %v467, 0.0
        %v520 = vmax.f32 %v469, 0.0
        %v521 = vmax.f32 %v472, 0.0
        %v522 = vmax.f32 %v474, 0.0
        %v523 = vmax.f32 %v477, 0.0
        %v524 = vmax.f32 %v479, 0.0
        %v525 = vmax.f32 %v482, 0.0
        %v526 = vmax.f32 %v484, 0.0
        %v527 = vmax.f32 %v487, 0.0
        %v528 = vmax.f32 %v489, 0.0
        %v529 = vmax.f32 %v492, 0.0
        %v530 = vmax.f32 %v494, 0.0
        %v531 = vmax.f32 %v497, 0.0
        %v532 = vmax.f32 %v499, 0.0
        %v533 = vadd.f32 %v501, %v502
        %v534 = vadd.f32 %v533, %v503
        %v535 = vadd.f32 %v534, %v504
        %v536 = vadd.f32 %v535, %v505
        %v537 = vadd.f32 %v536, %v506
        %v538 = vadd.f32 %v537, %v507
        %v539 = vadd.f32 %v538, %v508
        %v540 = vadd.f32 %v539, %v509
        %v541 = vadd.f32 %v540, %v510
        %v542 = vadd.f32 %v541, %v511
        %v543 = vadd.f32 %v542, %v512
        %v544 = vadd.f32 %v543, %v513
        %v545 = vadd.f32 %v544, %v514
        %v546 = vadd.f32 %v545, %v515
        %v547 = vadd.f32 %v546, %v516
        %v548 = vadd.f32 %v547, %v517
        %v549 = vadd.f32 %v548, %v518
        %v550 = vadd.f32 %v549, %v519
        %v551 = vadd.f32 %v550, %v520
        %v552 = vadd.f32 %v551, %v521
        %v553 = vadd.f32 %v552, %v522
        %v554 = vadd.f32 %v553, %v523
        %v555 = vadd.f32 %v554, %v524
        %v556 = vadd.f32 %v555, %v525
        %v557 = vadd.f32 %v556, %v526
        %v558 = vadd.f32 %v557, %v527
        %v559 = vadd.f32 %v558, %v528
        %v560 = vadd.f32 %v559, %v529
        %v561 = vadd.f32 %v560, %v530
        %v562 = vadd.f32 %v561, %v531
        %v563 = vadd.f32 %v562, %v532
        %v564 = vrot.slane %v563, 4
        %v565 = vadd.f32 %v563, %v564
        %v566 = vrot.slane %v565, 2
        %v567 = vadd.f32 %v565, %v566
        %v568 = vrot.slane %v567, 1
        %v569 = vadd.f32 %v567, %v568
        %v570 = vld [vmem:[%s3] sm:$0x1]
        %v571 = vmul.f32 %v569, %v570
        %vm572 = vcmask 1040384
        %v573 = vsel %vm572, %v571, 0.0
        %574 = vadd.xlane.f32.xlu0 %v573
        %v575 = vpop.xlane.xlu0 %574
        %v576 = vld [vmem:[%s4] sm:$0x1]
        %v577 = vadd.f32 %v575, %v576
        %v578 = vld [vmem:[%s3 + $0x1] sm:$0x1]
        %v579 = vmul.f32 %v569, %v578
        %v580 = vsel %vm572, %v579, 0.0
        %581 = vadd.xlane.f32.xlu0 %v580
        %v582 = vpop.xlane.xlu0 %581
        %v584 = vperm.slane %v576, 0
        %585 = vrot.lane.b32.xlu0 %v584, 127
        %v586 = vpop.permute.xlu0 %585
        %v588 = vadd.f32 %v582, %v586
        %v589 = vlaneseq
        %v590 = vand.u32 %v589, 127
        %vm591 = vcmp.eq.s32.totalorder %v590, 0
        %vm592 = vcmp.eq.s32.totalorder %v590, 1
        %594 = vset.pattern.permute.xlu0 0
        %595 = vperm.xlu0 %594, %v588
        %v596 = vpop.permute.xlu0 %595
        %v598 = vsel %vm592, %v596, 0.0
        %600 = vset.pattern.permute.xlu0 0
        %601 = vperm.xlu0 %600, %v577
        %v602 = vpop.permute.xlu0 %601
        %v604 = vsel %vm591, %v602, %v598
        %605 = vst [vmem:[%s216] sm:$0x1] %v604
        %s606 = sand.u32 %s137, 1
        %s607 = scalar_lea.sflag [#allocation3], %s606
        %s608 = sand.u32 %s137, 1
        %s609 = scalar_lea.vmem [#allocation2], %s608
        // Predicated region
        $region41: #{tpu_custom_call.1} parent=39 // pred_check
          %p610 = pneg %p147
        $region42: #{tpu_custom_call.1} parent=39 // pred_check_branch
          %612 = sbr.rel (%p610) target = $region44
        $region43: #{tpu_custom_call.1} parent=39 // pred_region
          %614 = vsyncadd %s607, 0
          %s615 = scalar_lea.hbm %s5, %s19
          %s617 = sshll.u32 %s609, 4
          %s618 = int_to_ptr.vmem [resolvable:$true] %s617
          %s619 = sshll.u32 %s615, 4
          %s620 = int_to_ptr.hbm [resolvable:$true] %s619
          %622 = dma.vmem_to_hbm [thread:$0]  %s618, 16, %s620, %s607
        $region44: #{tpu_custom_call.1} parent=39 // pred_fallthru
          _
      $region40: #{tpu_custom_call.1} parent=5 // pred_fallthru
        _
      %p623 = scmp.le.s32.totalorder 2, %s14
      // Predicated region
      $region45: #{tpu_custom_call.1} parent=5 // pred_check
        %p624 = pneg %p623
      $region46: #{tpu_custom_call.1} parent=5 // pred_check_branch
        %626 = sbr.rel (%p624) target = $region48
      $region47: #{tpu_custom_call.1} parent=5 // pred_region
        %s627 = ssub.s32 %s14, 2
        // Predicated region
        $region49: #{tpu_custom_call.1} parent=47 // pred_check
          %p628 = pneg %p153
        $region50: #{tpu_custom_call.1} parent=47 // pred_check_branch
          %630 = sbr.rel (%p628) target = $region52
        $region51: #{tpu_custom_call.1} parent=47 // pred_region
          %s631 = sand.u32 %s138, 1
          %s632 = scalar_lea.sflag [#allocation3], %s631
          %s633 = sand.u32 %s138, 1
          %s634 = scalar_lea.vmem [#allocation2], %s633
          %636 = dma.done %s632, 16
        $region52: #{tpu_custom_call.1} parent=47 // pred_fallthru
          _
      $region48: #{tpu_custom_call.1} parent=5 // pred_fallthru
        _
    $region6: #{tpu_custom_call.1} parent=1 // loop_footer
      %s18 = sadd.s32 1, %s14
    $region7: #{tpu_custom_call.1} parent=1 // loop_footer_branch
      %13 = sbr.rel target = $region3
    $region8: #{tpu_custom_call.1} parent=1 // loop_exit
      _
    %637 = vsyncpa [#allocation3], 1
    %s638 = scalar_lea.sflag [#allocation3], 1
    %639 = vsyncpa %s638, 1

</llo_original>
